<compile_context>
chip_gen: v7x
topology: tpu7x:2x2x1
jax: 0.10.0
libtpu: 0.0.40
codegen_flags: <defaults>
</compile_context>

<pallas_src>
import functools

import jax
import jax.numpy as jnp
from jax.experimental import pallas as pl
from jax.experimental.pallas import tpu as pltpu


_LANES = 128            # lane width
_MAX_BLOCK_ROWS = 2048  # sublane rows per grid step (1 MiB f32 per input block)
_TARGET_BLOCKS = 8      # aim for >= this many grid steps (v7x megacore + pipeline)


# ----------------------------- Pallas kernel -------------------------------

def _fold_to_tile(x, block_rows):
    # (block_rows, 128) -> (8, 128): sublane-tile-aligned regrouping + VPU adds
    # only (no cross-lane XLU reduce in the hot loop). The reshape only splits
    # the leading vreg-row dimension, so it is layout-preserving in Mosaic.
    return x.reshape(block_rows // 8, 8, _LANES).sum(axis=0)


def _bce_partial_kernel(n_rows, block_rows, needs_mask, p_ref, t_ref, o_ref):
    """One grid step: BCE over a (block_rows, 128) tile -> (8, 128) partial sums."""
    p = p_ref[...].astype(jnp.float32)
    t = t_ref[...].astype(jnp.float32)

    # PyTorch binary_cross_entropy clamps the log terms at -100.
    log_p = jnp.maximum(jnp.log(p), -100.0)
    log_1mp = jnp.maximum(jnp.log(1.0 - p), -100.0)
    loss = -(t * log_p + (1.0 - t) * log_1mp)

    if not needs_mask:
        o_ref[0] = _fold_to_tile(loss, block_rows)
    else:
        # Only the LAST block has overhang rows (reads past the array end);
        # gate the mask there so hot blocks stay pure log+FMA.
        pid = pl.program_id(0)
        last = pl.num_programs(0) - 1

        @pl.when(pid != last)
        def _():
            o_ref[0] = _fold_to_tile(loss, block_rows)

        @pl.when(pid == last)
        def _():
            row = jax.lax.broadcasted_iota(jnp.int32, loss.shape, 0)
            valid = (pid * block_rows + row) < n_rows
            o_ref[0] = _fold_to_tile(jnp.where(valid, loss, 0.0), block_rows)


def _choose_block_rows(rows):
    """Biggest useful block: multiple of 8, <= _MAX_BLOCK_ROWS, ~_TARGET_BLOCKS steps."""
    br = -(-rows // _TARGET_BLOCKS)   # cdiv: aim for ~_TARGET_BLOCKS grid steps
    br = -(-br // 8) * 8              # round up to the 8-row sublane tile
    return max(8, min(br, _MAX_BLOCK_ROWS))


def _bce_mean(predict, target):
    """binary_cross_entropy(predict, target), 'mean' reduction, via Pallas."""
    n_elem = predict.size
    p = predict.reshape(-1)
    t = target.reshape(-1)

    rows = -(-n_elem // _LANES)
    rows = max(rows, 8)               # at least one full (8, 128) tile
    pad = rows * _LANES - n_elem
    if pad:
        # Rare (element count not lane-aligned). Zero padding contributes
        # exactly 0 loss ((p=0, t=0) under the -100 clamp) so it needs no
        # in-kernel mask at all.
        p = jnp.pad(p, (0, pad))
        t = jnp.pad(t, (0, pad))

    p2 = p.reshape(rows, _LANES)
    t2 = t.reshape(rows, _LANES)

    br = _choose_block_rows(rows)
    nb = -(-rows // br)
    needs_mask = (rows % br) != 0     # only the last block has a row overhang

    kernel = functools.partial(_bce_partial_kernel, rows, br, needs_mask)

    partials = pl.pallas_call(
        kernel,
        out_shape=jax.ShapeDtypeStruct((nb, 8, _LANES), jnp.float32),
        grid=(nb,),
        in_specs=[
            pl.BlockSpec((br, _LANES), lambda i: (i, 0)),
            pl.BlockSpec((br, _LANES), lambda i: (i, 0)),
        ],
        out_specs=pl.BlockSpec((1, 8, _LANES), lambda i: (i, 0, 0)),
        compiler_params=pltpu.CompilerParams(
            dimension_semantics=("parallel",),
            vmem_limit_bytes=32 * 1024 * 1024,
        ),
    )(p2, t2)

    # Single tiny epilogue reduce (nb x 8 x 128 -> scalar) in XLA.
    return partials.sum() / jnp.float32(n_elem)


# ------------------------------ JAX glue ------------------------------------

def _interpolate_nearest(x, size):
    """F.interpolate(x, size=size, mode='nearest') for NCHW input."""
    in_h, in_w = x.shape[2], x.shape[3]
    out_h, out_w = int(size[0]), int(size[1])
    if (in_h, in_w) == (out_h, out_w):
        return x  # identity resize: skip the wasted HBM gather round-trip
    if in_h % out_h == 0 and in_w % out_w == 0:
        # Integer-factor downsample: nearest index floor(i*in/out) == i*(in//out),
        # so a cheap strided slice replaces the gather.
        return x[:, :, :: in_h // out_h, :: in_w // out_w]
    # General case: integer index arithmetic (i*in)//out (nearest), avoiding
    # float-rounding mismatches for odd size ratios.
    # TODO(synk): fuse this gather into the kernel's target DMA via
    # scalar-prefetched row indices to avoid materializing the resized target.
    idx_h = jnp.minimum((jnp.arange(out_h) * in_h) // out_h, in_h - 1)
    idx_w = jnp.minimum((jnp.arange(out_w) * in_w) // out_w, in_w - 1)
    return x[:, :, idx_h[:, None], idx_w[None, :]]


def _multiscaled_bce_loss(predict, target):
    """predict: list/tuple of NCHW arrays (one per scale); target: NCHW array."""
    # TODO(synk): for tiny pyramid scales, fuse all scales into one pallas_call
    # (scalar-prefetched per-block scale offsets) to drop N-1 kernel launches.
    losses = []
    for i in range(len(predict)):
        # NOTE: target is chained through scales, matching the PyTorch module.
        target = _interpolate_nearest(target, predict[i].shape[2:])
        losses.append(_bce_mean(predict[i], target))
    return jnp.stack(losses).mean()


multiscaled_bce_loss = jax.jit(_multiscaled_bce_loss)


# ------------------------------ reference ------------------------------------

def _reference_loss(predict, target):
    losses = []
    for i in range(len(predict)):
        target = _interpolate_nearest(target, predict[i].shape[2:])
        p = predict[i].astype(jnp.float32)
        t = target.astype(jnp.float32)
        log_p = jnp.maximum(jnp.log(p), -100.0)
        log_1mp = jnp.maximum(jnp.log(1.0 - p), -100.0)
        losses.append(jnp.mean(-(t * log_p + (1.0 - t) * log_1mp)))
    return jnp.stack(losses).mean()


# ------------------------------- demo ---------------------------------------

if __name__ == "__main__":
    key = jax.random.PRNGKey(0)
    n_scales = 3
    N, C = 2, 4
    # 16 -> identity skip; 12 -> general gather + masked last block; 6 -> strided slice.
    spatial = [16, 12, 6]

    keys = jax.random.split(key, n_scales + 1)
    predict = [
        jax.nn.sigmoid(jax.random.normal(keys[i], (N, C, s, s), jnp.float32))
        for i, s in enumerate(spatial)
    ]
    target = jax.random.uniform(keys[-1], (N, C, spatial[0], spatial[0]),
                                jnp.float32)

    loss = multiscaled_bce_loss(predict, target)
    jax.block_until_ready(loss)

    ref = _reference_loss(predict, target)
    assert jnp.allclose(loss, ref, rtol=1e-5, atol=1e-6), (loss, ref)
    print("KERNEL_OK")
</pallas_src>

<mosaic_0001>
module attributes {stable_mosaic.version = 11 : i64} {
  func.func @_bce_partial_kernel(%arg0: i32, %arg1: memref<8x128xf32, #tpu.memory_space<vmem>>, %arg2: memref<8x128xf32, #tpu.memory_space<vmem>>, %arg3: memref<1x8x128xf32, #tpu.memory_space<vmem>>) attributes {dimension_semantics = [#tpu.dimension_semantics<parallel>], iteration_bounds = array<i64: 2>, scalar_prefetch = 0 : i64, scratch_operands = 0 : i64, tpu.core_type = #tpu.core_type<tc>, window_params = [{transform_indices = @transform_0, window_bounds = array<i64: 8, 128>}, {transform_indices = @transform_1, window_bounds = array<i64: 8, 128>}, {transform_indices = @transform_2, window_bounds = array<i64: 1, 8, 128>}]} {
    %c0 = arith.constant 0 : index
    %c0_0 = arith.constant 0 : index
    %0 = vector.load %arg1[%c0, %c0_0] : memref<8x128xf32, #tpu.memory_space<vmem>>, vector<8x128xf32>
    %c0_1 = arith.constant 0 : index
    %c0_2 = arith.constant 0 : index
    %1 = vector.load %arg2[%c0_1, %c0_2] : memref<8x128xf32, #tpu.memory_space<vmem>>, vector<8x128xf32>
    %2 = math.log %0 : vector<8x128xf32>
    %cst = arith.constant -1.000000e+02 : f32
    %3 = vector.broadcast %cst : f32 to vector<8x128xf32>
    %4 = arith.maximumf %2, %3 : vector<8x128xf32>
    %cst_3 = arith.constant 1.000000e+00 : f32
    %5 = vector.broadcast %cst_3 : f32 to vector<8x128xf32>
    %6 = arith.subf %5, %0 : vector<8x128xf32>
    %7 = math.log %6 : vector<8x128xf32>
    %cst_4 = arith.constant -1.000000e+02 : f32
    %8 = vector.broadcast %cst_4 : f32 to vector<8x128xf32>
    %9 = arith.maximumf %7, %8 : vector<8x128xf32>
    %10 = arith.mulf %1, %4 : vector<8x128xf32>
    %cst_5 = arith.constant 1.000000e+00 : f32
    %11 = vector.broadcast %cst_5 : f32 to vector<8x128xf32>
    %12 = arith.subf %11, %1 : vector<8x128xf32>
    %13 = arith.mulf %12, %9 : vector<8x128xf32>
    %14 = arith.addf %10, %13 : vector<8x128xf32>
    %cst_6 = arith.constant 0.000000e+00 : f32
    %15 = vector.broadcast %cst_6 : f32 to vector<8x128xf32>
    %16 = arith.subf %15, %14 : vector<8x128xf32>
    %c1_i32 = arith.constant 1 : i32
    %17 = arith.cmpi ne, %arg0, %c1_i32 : i32
    %18 = arith.extui %17 : i1 to i32
    %c0_i32 = arith.constant 0 : i32
    %19 = arith.cmpi ne, %18, %c0_i32 : i32
    scf.if %19 {
      %23 = vector.shape_cast %16 : vector<8x128xf32> to vector<1x8x128xf32>
      %cst_9 = arith.constant dense<0.000000e+00> : vector<8x128xf32>
      %24 = vector.multi_reduction <add>, %23, %cst_9 [0] : vector<1x8x128xf32> to vector<8x128xf32>
      %c0_10 = arith.constant 0 : index
      %c0_11 = arith.constant 0 : index
      %c0_12 = arith.constant 0 : index
      %25 = vector.load %arg3[%c0_10, %c0_11, %c0_12] : memref<1x8x128xf32, #tpu.memory_space<vmem>>, vector<1x8x128xf32>
      %26 = vector.shape_cast %25 : vector<1x8x128xf32> to vector<8x128xf32>
      %27 = vector.shape_cast %24 : vector<8x128xf32> to vector<1x8x128xf32>
      tpu.vector_store %arg3[%c0_10, %c0_11, %c0_12], %27 {strides = array<i32>} : memref<1x8x128xf32, #tpu.memory_space<vmem>>, vector<1x8x128xf32>,
    } else {
    }
    %c1_i32_7 = arith.constant 1 : i32
    %20 = arith.cmpi eq, %arg0, %c1_i32_7 : i32
    %21 = arith.extui %20 : i1 to i32
    %c0_i32_8 = arith.constant 0 : i32
    %22 = arith.cmpi ne, %21, %c0_i32_8 : i32
    scf.if %22 {
      %23 = tpu.iota {dimensions = array<i32: 0>} : vector<8x128xi32>
      %c8_i32 = arith.constant 8 : i32
      %24 = arith.muli %arg0, %c8_i32 : i32
      %25 = vector.broadcast %24 : i32 to vector<8x128xi32>
      %26 = arith.addi %25, %23 : vector<8x128xi32>
      %c9_i32 = arith.constant 9 : i32
      %27 = vector.broadcast %c9_i32 : i32 to vector<8x128xi32>
      %28 = arith.cmpi slt, %26, %27 : vector<8x128xi32>
      %cst_9 = arith.constant 0.000000e+00 : f32
      %29 = vector.broadcast %cst_9 : f32 to vector<8x128xf32>
      %30 = arith.select %28, %16, %29 : vector<8x128xi1>, vector<8x128xf32>
      %31 = vector.shape_cast %30 : vector<8x128xf32> to vector<1x8x128xf32>
      %cst_10 = arith.constant dense<0.000000e+00> : vector<8x128xf32>
      %32 = vector.multi_reduction <add>, %31, %cst_10 [0] : vector<1x8x128xf32> to vector<8x128xf32>
      %c0_11 = arith.constant 0 : index
      %c0_12 = arith.constant 0 : index
      %c0_13 = arith.constant 0 : index
      %33 = vector.load %arg3[%c0_11, %c0_12, %c0_13] : memref<1x8x128xf32, #tpu.memory_space<vmem>>, vector<1x8x128xf32>
      %34 = vector.shape_cast %33 : vector<1x8x128xf32> to vector<8x128xf32>
      %35 = vector.shape_cast %32 : vector<8x128xf32> to vector<1x8x128xf32>
      tpu.vector_store %arg3[%c0_11, %c0_12, %c0_13], %35 {strides = array<i32>} : memref<1x8x128xf32, #tpu.memory_space<vmem>>, vector<1x8x128xf32>,
    } else {
    }
    return
  }
  func.func @transform_0(%arg0: i32) -> (i32, i32) {
    %c0_i32 = arith.constant 0 : i32
    %c0_i32_0 = arith.constant 0 : i32
    return %arg0, %c0_i32 : i32, i32
  }
  func.func @transform_1(%arg0: i32) -> (i32, i32) {
    %c0_i32 = arith.constant 0 : i32
    %c0_i32_0 = arith.constant 0 : i32
    return %arg0, %c0_i32 : i32, i32
  }
  func.func @transform_2(%arg0: i32) -> (i32, i32, i32) {
    %c0_i32 = arith.constant 0 : i32
    %c0_i32_0 = arith.constant 0 : i32
    %c0_i32_1 = arith.constant 0 : i32
    return %arg0, %c0_i32, %c0_i32_0 : i32, i32, i32
  }
}

module attributes {stable_mosaic.version = 11 : i64} {
  func.func @_bce_partial_kernel(%arg0: i32, %arg1: memref<8x128xf32, #tpu.memory_space<vmem>>, %arg2: memref<8x128xf32, #tpu.memory_space<vmem>>, %arg3: memref<1x8x128xf32, #tpu.memory_space<vmem>>) attributes {dimension_semantics = [#tpu.dimension_semantics<parallel>], iteration_bounds = array<i64: 2>, scalar_prefetch = 0 : i64, scratch_operands = 0 : i64, tpu.core_type = #tpu.core_type<tc>, window_params = [{transform_indices = @transform_0, window_bounds = array<i64: 8, 128>}, {transform_indices = @transform_1, window_bounds = array<i64: 8, 128>}, {transform_indices = @transform_2, window_bounds = array<i64: 1, 8, 128>}]} {
    %c0 = arith.constant 0 : index
    %c0_0 = arith.constant 0 : index
    %0 = vector.load %arg1[%c0, %c0_0] : memref<8x128xf32, #tpu.memory_space<vmem>>, vector<8x128xf32>
    %c0_1 = arith.constant 0 : index
    %c0_2 = arith.constant 0 : index
    %1 = vector.load %arg2[%c0_1, %c0_2] : memref<8x128xf32, #tpu.memory_space<vmem>>, vector<8x128xf32>
    %2 = math.log %0 : vector<8x128xf32>
    %cst = arith.constant -1.000000e+02 : f32
    %3 = vector.broadcast %cst : f32 to vector<8x128xf32>
    %4 = arith.maximumf %2, %3 : vector<8x128xf32>
    %cst_3 = arith.constant 1.000000e+00 : f32
    %5 = vector.broadcast %cst_3 : f32 to vector<8x128xf32>
    %6 = arith.subf %5, %0 : vector<8x128xf32>
    %7 = math.log %6 : vector<8x128xf32>
    %cst_4 = arith.constant -1.000000e+02 : f32
    %8 = vector.broadcast %cst_4 : f32 to vector<8x128xf32>
    %9 = arith.maximumf %7, %8 : vector<8x128xf32>
    %10 = arith.mulf %1, %4 : vector<8x128xf32>
    %cst_5 = arith.constant 1.000000e+00 : f32
    %11 = vector.broadcast %cst_5 : f32 to vector<8x128xf32>
    %12 = arith.subf %11, %1 : vector<8x128xf32>
    %13 = arith.mulf %12, %9 : vector<8x128xf32>
    %14 = arith.addf %10, %13 : vector<8x128xf32>
    %cst_6 = arith.constant 0.000000e+00 : f32
    %15 = vector.broadcast %cst_6 : f32 to vector<8x128xf32>
    %16 = arith.subf %15, %14 : vector<8x128xf32>
    %17 = vector.shape_cast %16 : vector<8x128xf32> to vector<1x8x128xf32>
    %cst_7 = arith.constant dense<0.000000e+00> : vector<8x128xf32>
    %18 = vector.multi_reduction <add>, %17, %cst_7 [0] : vector<1x8x128xf32> to vector<8x128xf32>
    %c0_8 = arith.constant 0 : index
    %c0_9 = arith.constant 0 : index
    %c0_10 = arith.constant 0 : index
    %19 = vector.load %arg3[%c0_8, %c0_9, %c0_10] : memref<1x8x128xf32, #tpu.memory_space<vmem>>, vector<1x8x128xf32>
    %20 = vector.shape_cast %19 : vector<1x8x128xf32> to vector<8x128xf32>
    %21 = vector.shape_cast %18 : vector<8x128xf32> to vector<1x8x128xf32>
    tpu.vector_store %arg3[%c0_8, %c0_9, %c0_10], %21 {strides = array<i32>} : memref<1x8x128xf32, #tpu.memory_space<vmem>>, vector<1x8x128xf32>,
    return
  }
  func.func @transform_0(%arg0: i32) -> (i32, i32) {
    %c0_i32 = arith.constant 0 : i32
    %c0_i32_0 = arith.constant 0 : i32
    return %arg0, %c0_i32 : i32, i32
  }
  func.func @transform_1(%arg0: i32) -> (i32, i32) {
    %c0_i32 = arith.constant 0 : i32
    %c0_i32_0 = arith.constant 0 : i32
    return %arg0, %c0_i32 : i32, i32
  }
  func.func @transform_2(%arg0: i32) -> (i32, i32, i32) {
    %c0_i32 = arith.constant 0 : i32
    %c0_i32_0 = arith.constant 0 : i32
    %c0_i32_1 = arith.constant 0 : i32
    return %arg0, %c0_i32, %c0_i32_0 : i32, i32, i32
  }
}

module attributes {stable_mosaic.version = 11 : i64} {
  func.func @_bce_partial_kernel(%arg0: i32, %arg1: memref<8x128xf32, #tpu.memory_space<vmem>>, %arg2: memref<8x128xf32, #tpu.memory_space<vmem>>, %arg3: memref<1x8x128xf32, #tpu.memory_space<vmem>>) attributes {dimension_semantics = [#tpu.dimension_semantics<parallel>], iteration_bounds = array<i64: 1>, scalar_prefetch = 0 : i64, scratch_operands = 0 : i64, tpu.core_type = #tpu.core_type<tc>, window_params = [{transform_indices = @transform_0, window_bounds = array<i64: 8, 128>}, {transform_indices = @transform_1, window_bounds = array<i64: 8, 128>}, {transform_indices = @transform_2, window_bounds = array<i64: 1, 8, 128>}]} {
    %c0 = arith.constant 0 : index
    %c0_0 = arith.constant 0 : index
    %0 = vector.load %arg1[%c0, %c0_0] : memref<8x128xf32, #tpu.memory_space<vmem>>, vector<8x128xf32>
    %c0_1 = arith.constant 0 : index
    %c0_2 = arith.constant 0 : index
    %1 = vector.load %arg2[%c0_1, %c0_2] : memref<8x128xf32, #tpu.memory_space<vmem>>, vector<8x128xf32>
    %2 = math.log %0 : vector<8x128xf32>
    %cst = arith.constant -1.000000e+02 : f32
    %3 = vector.broadcast %cst : f32 to vector<8x128xf32>
    %4 = arith.maximumf %2, %3 : vector<8x128xf32>
    %cst_3 = arith.constant 1.000000e+00 : f32
    %5 = vector.broadcast %cst_3 : f32 to vector<8x128xf32>
    %6 = arith.subf %5, %0 : vector<8x128xf32>
    %7 = math.log %6 : vector<8x128xf32>
    %cst_4 = arith.constant -1.000000e+02 : f32
    %8 = vector.broadcast %cst_4 : f32 to vector<8x128xf32>
    %9 = arith.maximumf %7, %8 : vector<8x128xf32>
    %10 = arith.mulf %1, %4 : vector<8x128xf32>
    %cst_5 = arith.constant 1.000000e+00 : f32
    %11 = vector.broadcast %cst_5 : f32 to vector<8x128xf32>
    %12 = arith.subf %11, %1 : vector<8x128xf32>
    %13 = arith.mulf %12, %9 : vector<8x128xf32>
    %14 = arith.addf %10, %13 : vector<8x128xf32>
    %cst_6 = arith.constant 0.000000e+00 : f32
    %15 = vector.broadcast %cst_6 : f32 to vector<8x128xf32>
    %16 = arith.subf %15, %14 : vector<8x128xf32>
    %17 = vector.shape_cast %16 : vector<8x128xf32> to vector<1x8x128xf32>
    %cst_7 = arith.constant dense<0.000000e+00> : vector<8x128xf32>
    %18 = vector.multi_reduction <add>, %17, %cst_7 [0] : vector<1x8x128xf32> to vector<8x128xf32>
    %c0_8 = arith.constant 0 : index
    %c0_9 = arith.constant 0 : index
    %c0_10 = arith.constant 0 : index
    %19 = vector.load %arg3[%c0_8, %c0_9, %c0_10] : memref<1x8x128xf32, #tpu.memory_space<vmem>>, vector<1x8x128xf32>
    %20 = vector.shape_cast %19 : vector<1x8x128xf32> to vector<8x128xf32>
    %21 = vector.shape_cast %18 : vector<8x128xf32> to vector<1x8x128xf32>
    tpu.vector_store %arg3[%c0_8, %c0_9, %c0_10], %21 {strides = array<i32>} : memref<1x8x128xf32, #tpu.memory_space<vmem>>, vector<1x8x128xf32>,
    return
  }
  func.func @transform_0(%arg0: i32) -> (i32, i32) {
    %c0_i32 = arith.constant 0 : i32
    %c0_i32_0 = arith.constant 0 : i32
    return %arg0, %c0_i32 : i32, i32
  }
  func.func @transform_1(%arg0: i32) -> (i32, i32) {
    %c0_i32 = arith.constant 0 : i32
    %c0_i32_0 = arith.constant 0 : i32
    return %arg0, %c0_i32 : i32, i32
  }
  func.func @transform_2(%arg0: i32) -> (i32, i32, i32) {
    %c0_i32 = arith.constant 0 : i32
    %c0_i32_0 = arith.constant 0 : i32
    %c0_i32_1 = arith.constant 0 : i32
    return %arg0, %c0_i32, %c0_i32_0 : i32, i32, i32
  }
}

</mosaic_0001>

<llo_original>
// kernel: _multiscaled_bce_loss.4
$region0: #{_multiscaled_bce_loss.4}
  #allocation0 [shape = 'u32[]', space=smem, size = 0x4, offset = 0x4, fixed_abs, tag = 'smem constant byte address 0x4 - core index']
  #allocation1 [shape = 'u32[144,128]{1,0:T(1,128)}', space=vmem, size = 0x12000, scoped, tag = 'internal scratch']
  %s0 = inlined_call_operand.vmem [shape: f32[9,128], index: 0, kind: input, shape index: {}]
  %s1 = inlined_call_operand.vmem [shape: f32[9,128], index: 1, kind: input, shape index: {}]
  %s2 = inlined_call_operand.vmem [shape: f32[2,8,128], index: 2, kind: output, shape index: {}]
  %s3 = sld [smem:[#allocation0]]
  $region49: #{_multiscaled_bce_loss.4} parent=0
    _
  %s5 = ssub.s32 1, %s3
  %s6 = scalar_select 0, %s5, %s3
  loop: start=0, step=1, limit=4
  $region2: #{_multiscaled_bce_loss.4} parent=0 // loop_pre_header
    _
  $region3: #{_multiscaled_bce_loss.4} parent=0 // loop_header
    %s8 = sphi 0, %s12
    %p9 = scmp.ge.s32.totalorder %s8, 4
    %s18 = sphi 0, %s20
    %s21 = sphi 0, %s18
    %s22 = sphi 0, %s21
    %s38 = sphi 0, %s22
    %s44 = sphi 0, %s46
    %s47 = sphi 0, %s44
    %s48 = sphi 0, %s47
    %s64 = sphi 0, %s48
    %s70 = sphi 0, %s72
    %s73 = sphi 0, %s70
    %s74 = sphi 0, %s73
    %s90 = sphi 0, %s74
  $region4: #{_multiscaled_bce_loss.4} parent=0 // loop_header_branch
    %11 = sbr.rel (%p9) target = $region8
  $region5: #{_multiscaled_bce_loss.4} parent=0 // loop_body
    %s13 = ssub.s32 %s8, 1
    %s14 = ssub.s32 %s8, 2
    %s15 = sadd.s32 %s8, 1
    %s16 = ssub.s32 %s8, %s15
    %p17 = scmp.eq.s32.totalorder %s16, 0
    %s19 = sadd.s32 %s18, 1
    %s20 = scalar_select %p17, %s18, %s19
    %p23 = pneg %p17
    %p24 = scmp.eq.s32.totalorder %s8, 1
    %p25 = por %p23, %p24
    %p26 = scmp.ne.s32.totalorder %s18, %s21
    %p27 = scmp.eq.s32.totalorder %s8, 0
    %p28 = por %p26, %p27
    %p29 = scmp.ne.s32.totalorder %s18, %s21
    %p30 = scmp.eq.s32.totalorder %s13, 1
    %p31 = por %p29, %p30
    %p32 = scmp.ne.s32.totalorder %s21, %s22
    %p33 = scmp.eq.s32.totalorder %s13, 0
    %p34 = por %p32, %p33
    %p35 = scmp.ne.s32.totalorder %s21, %s22
    %p36 = scmp.eq.s32.totalorder %s14, 1
    %p37 = por %p35, %p36
    %p39 = scmp.ne.s32.totalorder %s22, %s38
    %p40 = scmp.eq.s32.totalorder %s14, 0
    %p41 = por %p39, %p40
    %s42 = ssub.s32 %s8, %s15
    %p43 = scmp.eq.s32.totalorder %s42, 0
    %s45 = sadd.s32 %s44, 1
    %s46 = scalar_select %p43, %s44, %s45
    %p49 = pneg %p43
    %p50 = scmp.eq.s32.totalorder %s8, 1
    %p51 = por %p49, %p50
    %p52 = scmp.ne.s32.totalorder %s44, %s47
    %p53 = scmp.eq.s32.totalorder %s8, 0
    %p54 = por %p52, %p53
    %p55 = scmp.ne.s32.totalorder %s44, %s47
    %p56 = scmp.eq.s32.totalorder %s13, 1
    %p57 = por %p55, %p56
    %p58 = scmp.ne.s32.totalorder %s47, %s48
    %p59 = scmp.eq.s32.totalorder %s13, 0
    %p60 = por %p58, %p59
    %p61 = scmp.ne.s32.totalorder %s47, %s48
    %p62 = scmp.eq.s32.totalorder %s14, 1
    %p63 = por %p61, %p62
    %p65 = scmp.ne.s32.totalorder %s48, %s64
    %p66 = scmp.eq.s32.totalorder %s14, 0
    %p67 = por %p65, %p66
    %s68 = ssub.s32 %s8, %s15
    %p69 = scmp.eq.s32.totalorder %s68, 0
    %s71 = sadd.s32 %s70, 1
    %s72 = scalar_select %p69, %s70, %s71
    %p75 = pneg %p69
    %p76 = scmp.eq.s32.totalorder %s8, 1
    %p77 = por %p75, %p76
    %p78 = scmp.ne.s32.totalorder %s70, %s73
    %p79 = scmp.eq.s32.totalorder %s8, 0
    %p80 = por %p78, %p79
    %p81 = scmp.ne.s32.totalorder %s70, %s73
    %p82 = scmp.eq.s32.totalorder %s13, 1
    %p83 = por %p81, %p82
    %p84 = scmp.ne.s32.totalorder %s73, %s74
    %p85 = scmp.eq.s32.totalorder %s13, 0
    %p86 = por %p84, %p85
    %p87 = scmp.ne.s32.totalorder %s73, %s74
    %p88 = scmp.eq.s32.totalorder %s14, 1
    %p89 = por %p87, %p88
    %p91 = scmp.ne.s32.totalorder %s74, %s90
    %p92 = scmp.eq.s32.totalorder %s14, 0
    %p93 = por %p91, %p92
    %p94 = scmp.le.s32.totalorder 1, %s8
    %p95 = scmp.lt.s32.totalorder %s8, 3
    %p96 = pnand %p94, %p95
    %p97 = pneg %p96
    // Predicated region
    $region9: #{_multiscaled_bce_loss.4} parent=5 // pred_check
      _
    $region10: #{_multiscaled_bce_loss.4} parent=5 // pred_check_branch
      %99 = sbr.rel (%p96) target = $region12
    $region11: #{_multiscaled_bce_loss.4} parent=5 // pred_region
      %s100 = ssub.s32 %s8, 1
    $region12: #{_multiscaled_bce_loss.4} parent=5 // pred_fallthru
      _
    %p101 = scmp.lt.s32.totalorder %s8, 2
    // Predicated region
    $region13: #{_multiscaled_bce_loss.4} parent=5 // pred_check
      %p102 = pneg %p101
    $region14: #{_multiscaled_bce_loss.4} parent=5 // pred_check_branch
      %104 = sbr.rel (%p102) target = $region16
    $region15: #{_multiscaled_bce_loss.4} parent=5 // pred_region
      // Predicated region
      $region17: #{_multiscaled_bce_loss.4} parent=15 // pred_check
        %p105 = pneg %p28
      $region18: #{_multiscaled_bce_loss.4} parent=15 // pred_check_branch
        %107 = sbr.rel (%p105) target = $region20
      $region19: #{_multiscaled_bce_loss.4} parent=15 // pred_region
        %p108 = scmp.lt.s32.totalorder %s8, 1
        %s109 = scalar_select %p108, %s8, 1
        %s110 = smul.addr %s109, 8
        %s111 = scalar_lea.vmem %s0, %s110
      $region20: #{_multiscaled_bce_loss.4} parent=15 // pred_fallthru
        _
      // Predicated region
      $region21: #{_multiscaled_bce_loss.4} parent=15 // pred_check
        %p112 = pneg %p54
      $region22: #{_multiscaled_bce_loss.4} parent=15 // pred_check_branch
        %114 = sbr.rel (%p112) target = $region24
      $region23: #{_multiscaled_bce_loss.4} parent=15 // pred_region
        %p115 = scmp.lt.s32.totalorder %s8, 1
        %s116 = scalar_select %p115, %s8, 1
        %s117 = smul.addr %s116, 8
        %s118 = scalar_lea.vmem %s1, %s117
      $region24: #{_multiscaled_bce_loss.4} parent=15 // pred_fallthru
        _
    $region16: #{_multiscaled_bce_loss.4} parent=5 // pred_fallthru
      _
    %p119 = scmp.le.s32.totalorder 1, %s8
    %p120 = scmp.lt.s32.totalorder %s8, 3
    %p121 = pnand %p119, %p120
    %p122 = pneg %p121
    // Predicated region
    $region25: #{_multiscaled_bce_loss.4} parent=5 // pred_check
      _
    $region26: #{_multiscaled_bce_loss.4} parent=5 // pred_check_branch
      %124 = sbr.rel (%p121) target = $region28
    $region27: #{_multiscaled_bce_loss.4} parent=5 // pred_region
      %s125 = ssub.s32 %s8, 1
      %p126 = scmp.lt.s32.totalorder %s13, 1
      %s127 = scalar_select %p126, %s13, 1
      %s128 = smul.addr %s127, 8
      %s129 = scalar_lea.vmem %s0, %s128
      %p130 = pneg %p34
      %p131 = pneg %p31
      %p132 = scmp.lt.s32.totalorder %s13, 1
      %s133 = scalar_select %p132, %s13, 1
      %s134 = smul.addr %s133, 8
      %s135 = scalar_lea.vmem %s1, %s134
      %p136 = pneg %p60
      %p137 = pneg %p57
      %p138 = pneg %p86
      %p139 = pneg %p83
      %p140 = scmp.lt.s32.totalorder %s13, 1
      %s141 = scalar_select %p140, %s13, 1
      %s142 = smul.addr %s141, 8
      %s143 = scalar_lea.vmem %s2, %s142
      %p144 = scmp.lt.s32.totalorder %s13, 1
      %s145 = scalar_select %p144, %s13, 1
      %s146 = smul.addr %s145, 8
      %s147 = scalar_lea.vmem %s0, %s146
      %p148 = scmp.lt.s32.totalorder %s13, 1
      %s149 = scalar_select %p148, %s13, 1
      %s150 = smul.addr %s149, 8
      %s151 = scalar_lea.vmem %s1, %s150
      %p152 = scmp.lt.s32.totalorder %s13, 1
      %s153 = scalar_select %p152, %s13, 1
      %s154 = smul.addr %s153, 8
      %s155 = scalar_lea.vmem %s2, %s154
      %v156 = vld [vmem:[%s147] sm:$0xff]
      %v157 = vld [vmem:[%s151] sm:$0xff]
      %v158 = vlog2.pop %v156
      %v159 = vmul.f32 %v158, 0.6931472
      %v160 = vmax.f32 %v159, -100.0
      %v161 = vsub.f32 1.0, %v156
      %v162 = vlog2.pop %v161
      %v163 = vmul.f32 %v162, 0.6931472
      %v164 = vmax.f32 %v163, -100.0
      %v165 = vmul.f32 %v157, %v160
      %v166 = vsub.f32 1.0, %v157
      %v167 = vmul.f32 %v166, %v164
      %v168 = vadd.f32 %v165, %v167
      %v169 = vsub.f32 0.0, %v168
      %p170 = scmp.ne.s32.totalorder %s13, 1
      // Predicated region
      $region29: #{_multiscaled_bce_loss.4} parent=27 // pred_check
        %p171 = pneg %p170
      $region30: #{_multiscaled_bce_loss.4} parent=27 // pred_check_branch
        %173 = sbr.rel (%p171) target = $region32
      $region31: #{_multiscaled_bce_loss.4} parent=27 // pred_region
        %v174 = vadd.f32 %v169, 0.0
        %175 = vst [vmem:[%s155] sm:$0xff] %v174
      $region32: #{_multiscaled_bce_loss.4} parent=27 // pred_fallthru
        _
      %p176 = scmp.eq.s32.totalorder %s13, 1
      // Predicated region
      $region33: #{_multiscaled_bce_loss.4} parent=27 // pred_check
        %p177 = pneg %p176
      $region34: #{_multiscaled_bce_loss.4} parent=27 // pred_check_branch
        %179 = sbr.rel (%p177) target = $region36
      $region35: #{_multiscaled_bce_loss.4} parent=27 // pred_region
        %v180 = vlaneseq
        %v181 = vshrl.u32 %v180, 7
        %s182 = smul.u32 %s13, 8
        %v183 = vstv %s182
        %v184 = vadd.s32 %v183, %v181
        %vm185 = vcmp.lt.s32.totalorder %v184, 9
        %v186 = vsel %vm185, %v169, 0.0
        %v187 = vadd.f32 %v186, 0.0
        %188 = vst [vmem:[%s155] sm:$0xff] %v187
      $region36: #{_multiscaled_bce_loss.4} parent=27 // pred_fallthru
        _
      %p189 = scmp.lt.s32.totalorder %s13, 1
      %s190 = scalar_select %p189, %s13, 1
      %s191 = smul.addr %s190, 8
      %s192 = scalar_lea.vmem %s2, %s191
      // Predicated region
      $region37: #{_multiscaled_bce_loss.4} parent=27 // pred_check
        %p193 = pneg %p83
      $region38: #{_multiscaled_bce_loss.4} parent=27 // pred_check_branch
        %195 = sbr.rel (%p193) target = $region40
      $region39: #{_multiscaled_bce_loss.4} parent=27 // pred_region
        _
      $region40: #{_multiscaled_bce_loss.4} parent=27 // pred_fallthru
        _
    $region28: #{_multiscaled_bce_loss.4} parent=5 // pred_fallthru
      _
    %p196 = scmp.le.s32.totalorder 2, %s8
    // Predicated region
    $region41: #{_multiscaled_bce_loss.4} parent=5 // pred_check
      %p197 = pneg %p196
    $region42: #{_multiscaled_bce_loss.4} parent=5 // pred_check_branch
      %199 = sbr.rel (%p197) target = $region44
    $region43: #{_multiscaled_bce_loss.4} parent=5 // pred_region
      %s200 = ssub.s32 %s8, 2
      // Predicated region
      $region45: #{_multiscaled_bce_loss.4} parent=43 // pred_check
        %p201 = pneg %p89
      $region46: #{_multiscaled_bce_loss.4} parent=43 // pred_check_branch
        %203 = sbr.rel (%p201) target = $region48
      $region47: #{_multiscaled_bce_loss.4} parent=43 // pred_region
        %p204 = scmp.lt.s32.totalorder %s14, 1
        %s205 = scalar_select %p204, %s14, 1
        %s206 = smul.addr %s205, 8
        %s207 = scalar_lea.vmem %s2, %s206
      $region48: #{_multiscaled_bce_loss.4} parent=43 // pred_fallthru
        _
    $region44: #{_multiscaled_bce_loss.4} parent=5 // pred_fallthru
      _
  $region6: #{_multiscaled_bce_loss.4} parent=0 // loop_footer
    %s12 = sadd.s32 1, %s8
  $region7: #{_multiscaled_bce_loss.4} parent=0 // loop_footer_branch
    %7 = sbr.rel target = $region3
  $region8: #{_multiscaled_bce_loss.4} parent=0 // loop_exit
    _

// kernel: _multiscaled_bce_loss.3
$region0: #{_multiscaled_bce_loss.3}
  #allocation0 [shape = 'u32[]', space=smem, size = 0x4, offset = 0x4, fixed_abs, tag = 'smem constant byte address 0x4 - core index']
  #allocation1 [shape = 'u32[144,128]{1,0:T(1,128)}', space=vmem, size = 0x12000, scoped, tag = 'internal scratch']
  %s0 = inlined_call_operand.vmem [shape: f32[16,128], index: 0, kind: input, shape index: {}]
  %s1 = inlined_call_operand.vmem [shape: f32[16,128], index: 1, kind: input, shape index: {}]
  %s2 = inlined_call_operand.vmem [shape: f32[2,8,128], index: 2, kind: output, shape index: {}]
  %s3 = sld [smem:[#allocation0]]
  $region41: #{_multiscaled_bce_loss.3} parent=0
    _
  %s5 = ssub.s32 1, %s3
  %s6 = scalar_select 0, %s5, %s3
  loop: start=0, step=1, limit=4
  $region2: #{_multiscaled_bce_loss.3} parent=0 // loop_pre_header
    _
  $region3: #{_multiscaled_bce_loss.3} parent=0 // loop_header
    %s8 = sphi 0, %s12
    %p9 = scmp.ge.s32.totalorder %s8, 4
    %s18 = sphi 0, %s20
    %s21 = sphi 0, %s18
    %s22 = sphi 0, %s21
    %s38 = sphi 0, %s22
    %s44 = sphi 0, %s46
    %s47 = sphi 0, %s44
    %s48 = sphi 0, %s47
    %s64 = sphi 0, %s48
    %s70 = sphi 0, %s72
    %s73 = sphi 0, %s70
    %s74 = sphi 0, %s73
    %s90 = sphi 0, %s74
  $region4: #{_multiscaled_bce_loss.3} parent=0 // loop_header_branch
    %11 = sbr.rel (%p9) target = $region8
  $region5: #{_multiscaled_bce_loss.3} parent=0 // loop_body
    %s13 = ssub.s32 %s8, 1
    %s14 = ssub.s32 %s8, 2
    %s15 = sadd.s32 %s8, 1
    %s16 = ssub.s32 %s8, %s15
    %p17 = scmp.eq.s32.totalorder %s16, 0
    %s19 = sadd.s32 %s18, 1
    %s20 = scalar_select %p17, %s18, %s19
    %p23 = pneg %p17
    %p24 = scmp.eq.s32.totalorder %s8, 1
    %p25 = por %p23, %p24
    %p26 = scmp.ne.s32.totalorder %s18, %s21
    %p27 = scmp.eq.s32.totalorder %s8, 0
    %p28 = por %p26, %p27
    %p29 = scmp.ne.s32.totalorder %s18, %s21
    %p30 = scmp.eq.s32.totalorder %s13, 1
    %p31 = por %p29, %p30
    %p32 = scmp.ne.s32.totalorder %s21, %s22
    %p33 = scmp.eq.s32.totalorder %s13, 0
    %p34 = por %p32, %p33
    %p35 = scmp.ne.s32.totalorder %s21, %s22
    %p36 = scmp.eq.s32.totalorder %s14, 1
    %p37 = por %p35, %p36
    %p39 = scmp.ne.s32.totalorder %s22, %s38
    %p40 = scmp.eq.s32.totalorder %s14, 0
    %p41 = por %p39, %p40
    %s42 = ssub.s32 %s8, %s15
    %p43 = scmp.eq.s32.totalorder %s42, 0
    %s45 = sadd.s32 %s44, 1
    %s46 = scalar_select %p43, %s44, %s45
    %p49 = pneg %p43
    %p50 = scmp.eq.s32.totalorder %s8, 1
    %p51 = por %p49, %p50
    %p52 = scmp.ne.s32.totalorder %s44, %s47
    %p53 = scmp.eq.s32.totalorder %s8, 0
    %p54 = por %p52, %p53
    %p55 = scmp.ne.s32.totalorder %s44, %s47
    %p56 = scmp.eq.s32.totalorder %s13, 1
    %p57 = por %p55, %p56
    %p58 = scmp.ne.s32.totalorder %s47, %s48
    %p59 = scmp.eq.s32.totalorder %s13, 0
    %p60 = por %p58, %p59
    %p61 = scmp.ne.s32.totalorder %s47, %s48
    %p62 = scmp.eq.s32.totalorder %s14, 1
    %p63 = por %p61, %p62
    %p65 = scmp.ne.s32.totalorder %s48, %s64
    %p66 = scmp.eq.s32.totalorder %s14, 0
    %p67 = por %p65, %p66
    %s68 = ssub.s32 %s8, %s15
    %p69 = scmp.eq.s32.totalorder %s68, 0
    %s71 = sadd.s32 %s70, 1
    %s72 = scalar_select %p69, %s70, %s71
    %p75 = pneg %p69
    %p76 = scmp.eq.s32.totalorder %s8, 1
    %p77 = por %p75, %p76
    %p78 = scmp.ne.s32.totalorder %s70, %s73
    %p79 = scmp.eq.s32.totalorder %s8, 0
    %p80 = por %p78, %p79
    %p81 = scmp.ne.s32.totalorder %s70, %s73
    %p82 = scmp.eq.s32.totalorder %s13, 1
    %p83 = por %p81, %p82
    %p84 = scmp.ne.s32.totalorder %s73, %s74
    %p85 = scmp.eq.s32.totalorder %s13, 0
    %p86 = por %p84, %p85
    %p87 = scmp.ne.s32.totalorder %s73, %s74
    %p88 = scmp.eq.s32.totalorder %s14, 1
    %p89 = por %p87, %p88
    %p91 = scmp.ne.s32.totalorder %s74, %s90
    %p92 = scmp.eq.s32.totalorder %s14, 0
    %p93 = por %p91, %p92
    %p94 = scmp.le.s32.totalorder 1, %s8
    %p95 = scmp.lt.s32.totalorder %s8, 3
    %p96 = pnand %p94, %p95
    %p97 = pneg %p96
    // Predicated region
    $region9: #{_multiscaled_bce_loss.3} parent=5 // pred_check
      _
    $region10: #{_multiscaled_bce_loss.3} parent=5 // pred_check_branch
      %99 = sbr.rel (%p96) target = $region12
    $region11: #{_multiscaled_bce_loss.3} parent=5 // pred_region
      %s100 = ssub.s32 %s8, 1
    $region12: #{_multiscaled_bce_loss.3} parent=5 // pred_fallthru
      _
    %p101 = scmp.lt.s32.totalorder %s8, 2
    // Predicated region
    $region13: #{_multiscaled_bce_loss.3} parent=5 // pred_check
      %p102 = pneg %p101
    $region14: #{_multiscaled_bce_loss.3} parent=5 // pred_check_branch
      %104 = sbr.rel (%p102) target = $region16
    $region15: #{_multiscaled_bce_loss.3} parent=5 // pred_region
      // Predicated region
      $region17: #{_multiscaled_bce_loss.3} parent=15 // pred_check
        %p105 = pneg %p28
      $region18: #{_multiscaled_bce_loss.3} parent=15 // pred_check_branch
        %107 = sbr.rel (%p105) target = $region20
      $region19: #{_multiscaled_bce_loss.3} parent=15 // pred_region
        %p108 = scmp.lt.s32.totalorder %s8, 1
        %s109 = scalar_select %p108, %s8, 1
        %s110 = smul.addr %s109, 8
        %s111 = scalar_lea.vmem %s0, %s110
      $region20: #{_multiscaled_bce_loss.3} parent=15 // pred_fallthru
        _
      // Predicated region
      $region21: #{_multiscaled_bce_loss.3} parent=15 // pred_check
        %p112 = pneg %p54
      $region22: #{_multiscaled_bce_loss.3} parent=15 // pred_check_branch
        %114 = sbr.rel (%p112) target = $region24
      $region23: #{_multiscaled_bce_loss.3} parent=15 // pred_region
        %p115 = scmp.lt.s32.totalorder %s8, 1
        %s116 = scalar_select %p115, %s8, 1
        %s117 = smul.addr %s116, 8
        %s118 = scalar_lea.vmem %s1, %s117
      $region24: #{_multiscaled_bce_loss.3} parent=15 // pred_fallthru
        _
    $region16: #{_multiscaled_bce_loss.3} parent=5 // pred_fallthru
      _
    %p119 = scmp.le.s32.totalorder 1, %s8
    %p120 = scmp.lt.s32.totalorder %s8, 3
    %p121 = pnand %p119, %p120
    %p122 = pneg %p121
    // Predicated region
    $region25: #{_multiscaled_bce_loss.3} parent=5 // pred_check
      _
    $region26: #{_multiscaled_bce_loss.3} parent=5 // pred_check_branch
      %124 = sbr.rel (%p121) target = $region28
    $region27: #{_multiscaled_bce_loss.3} parent=5 // pred_region
      %s125 = ssub.s32 %s8, 1
      %p126 = scmp.lt.s32.totalorder %s13, 1
      %s127 = scalar_select %p126, %s13, 1
      %s128 = smul.addr %s127, 8
      %s129 = scalar_lea.vmem %s0, %s128
      %p130 = pneg %p34
      %p131 = pneg %p31
      %p132 = scmp.lt.s32.totalorder %s13, 1
      %s133 = scalar_select %p132, %s13, 1
      %s134 = smul.addr %s133, 8
      %s135 = scalar_lea.vmem %s1, %s134
      %p136 = pneg %p60
      %p137 = pneg %p57
      %p138 = pneg %p86
      %p139 = pneg %p83
      %p140 = scmp.lt.s32.totalorder %s13, 1
      %s141 = scalar_select %p140, %s13, 1
      %s142 = smul.addr %s141, 8
      %s143 = scalar_lea.vmem %s2, %s142
      %p144 = scmp.lt.s32.totalorder %s13, 1
      %s145 = scalar_select %p144, %s13, 1
      %s146 = smul.addr %s145, 8
      %s147 = scalar_lea.vmem %s0, %s146
      %p148 = scmp.lt.s32.totalorder %s13, 1
      %s149 = scalar_select %p148, %s13, 1
      %s150 = smul.addr %s149, 8
      %s151 = scalar_lea.vmem %s1, %s150
      %p152 = scmp.lt.s32.totalorder %s13, 1
      %s153 = scalar_select %p152, %s13, 1
      %s154 = smul.addr %s153, 8
      %s155 = scalar_lea.vmem %s2, %s154
      %v156 = vld [vmem:[%s147] sm:$0xff]
      %v157 = vld [vmem:[%s151] sm:$0xff]
      %v158 = vlog2.pop %v156
      %v159 = vmul.f32 %v158, 0.6931472
      %v160 = vmax.f32 %v159, -100.0
      %v161 = vsub.f32 1.0, %v156
      %v162 = vlog2.pop %v161
      %v163 = vmul.f32 %v162, 0.6931472
      %v164 = vmax.f32 %v163, -100.0
      %v165 = vmul.f32 %v157, %v160
      %v166 = vsub.f32 1.0, %v157
      %v167 = vmul.f32 %v166, %v164
      %v168 = vadd.f32 %v165, %v167
      %v169 = vsub.f32 0.0, %v168
      %v170 = vadd.f32 %v169, 0.0
      %171 = vst [vmem:[%s155] sm:$0xff] %v170
      %p172 = scmp.lt.s32.totalorder %s13, 1
      %s173 = scalar_select %p172, %s13, 1
      %s174 = smul.addr %s173, 8
      %s175 = scalar_lea.vmem %s2, %s174
      // Predicated region
      $region29: #{_multiscaled_bce_loss.3} parent=27 // pred_check
        %p176 = pneg %p83
      $region30: #{_multiscaled_bce_loss.3} parent=27 // pred_check_branch
        %178 = sbr.rel (%p176) target = $region32
      $region31: #{_multiscaled_bce_loss.3} parent=27 // pred_region
        _
      $region32: #{_multiscaled_bce_loss.3} parent=27 // pred_fallthru
        _
    $region28: #{_multiscaled_bce_loss.3} parent=5 // pred_fallthru
      _
    %p179 = scmp.le.s32.totalorder 2, %s8
    // Predicated region
    $region33: #{_multiscaled_bce_loss.3} parent=5 // pred_check
      %p180 = pneg %p179
    $region34: #{_multiscaled_bce_loss.3} parent=5 // pred_check_branch
      %182 = sbr.rel (%p180) target = $region36
    $region35: #{_multiscaled_bce_loss.3} parent=5 // pred_region
      %s183 = ssub.s32 %s8, 2
      // Predicated region
      $region37: #{_multiscaled_bce_loss.3} parent=35 // pred_check
        %p184 = pneg %p89
      $region38: #{_multiscaled_bce_loss.3} parent=35 // pred_check_branch
        %186 = sbr.rel (%p184) target = $region40
      $region39: #{_multiscaled_bce_loss.3} parent=35 // pred_region
        %p187 = scmp.lt.s32.totalorder %s14, 1
        %s188 = scalar_select %p187, %s14, 1
        %s189 = smul.addr %s188, 8
        %s190 = scalar_lea.vmem %s2, %s189
      $region40: #{_multiscaled_bce_loss.3} parent=35 // pred_fallthru
        _
    $region36: #{_multiscaled_bce_loss.3} parent=5 // pred_fallthru
      _
  $region6: #{_multiscaled_bce_loss.3} parent=0 // loop_footer
    %s12 = sadd.s32 1, %s8
  $region7: #{_multiscaled_bce_loss.3} parent=0 // loop_footer_branch
    %7 = sbr.rel target = $region3
  $region8: #{_multiscaled_bce_loss.3} parent=0 // loop_exit
    _

// kernel: _multiscaled_bce_loss.5
$region0: #{_multiscaled_bce_loss.5}
  #allocation0 [shape = 'u32[]', space=smem, size = 0x4, offset = 0x4, fixed_abs, tag = 'smem constant byte address 0x4 - core index']
  #allocation1 [shape = 'u32[144,128]{1,0:T(1,128)}', space=vmem, size = 0x12000, scoped, tag = 'internal scratch']
  %s0 = inlined_call_operand.vmem [shape: f32[8,128], index: 0, kind: input, shape index: {}]
  %s1 = inlined_call_operand.vmem [shape: f32[8,128], index: 1, kind: input, shape index: {}]
  %s2 = inlined_call_operand.vmem [shape: f32[1,8,128], index: 2, kind: output, shape index: {}]
  %s3 = sld [smem:[#allocation0]]
  $region18: #{_multiscaled_bce_loss.5} parent=0
    _
  %s5 = ssub.s32 1, %s3
  %s6 = scalar_select 0, %s5, %s3
  // Predicated region
  $region2: #{_multiscaled_bce_loss.5} parent=0 // pred_check
    _
  $region3: #{_multiscaled_bce_loss.5} parent=0 // pred_check_branch
    %8 = sbr.rel (0) target = $region5
  $region4: #{_multiscaled_bce_loss.5} parent=0 // pred_region
    _
  $region5: #{_multiscaled_bce_loss.5} parent=0 // pred_fallthru
    _
  // Predicated region
  $region6: #{_multiscaled_bce_loss.5} parent=0 // pred_check
    _
  $region7: #{_multiscaled_bce_loss.5} parent=0 // pred_check_branch
    %10 = sbr.rel (0) target = $region9
  $region8: #{_multiscaled_bce_loss.5} parent=0 // pred_region
    _
  $region9: #{_multiscaled_bce_loss.5} parent=0 // pred_fallthru
    _
  %v11 = vld [vmem:[%s0] sm:$0xff]
  %v12 = vld [vmem:[%s1] sm:$0xff]
  %v13 = vlog2.pop %v11
  %v14 = vmul.f32 %v13, 0.6931472
  %v15 = vmax.f32 %v14, -100.0
  %v16 = vsub.f32 1.0, %v11
  %v17 = vlog2.pop %v16
  %v18 = vmul.f32 %v17, 0.6931472
  %v19 = vmax.f32 %v18, -100.0
  %v20 = vmul.f32 %v12, %v15
  %v21 = vsub.f32 1.0, %v12
  %v22 = vmul.f32 %v21, %v19
  %v23 = vadd.f32 %v20, %v22
  %v24 = vsub.f32 0.0, %v23
  %v25 = vadd.f32 %v24, 0.0
  %26 = vst [vmem:[%s2] sm:$0xff] %v25
  // Predicated region
  $region10: #{_multiscaled_bce_loss.5} parent=0 // pred_check
    _
  $region11: #{_multiscaled_bce_loss.5} parent=0 // pred_check_branch
    %28 = sbr.rel (0) target = $region13
  $region12: #{_multiscaled_bce_loss.5} parent=0 // pred_region
    _
  $region13: #{_multiscaled_bce_loss.5} parent=0 // pred_fallthru
    _
  // Predicated region
  $region14: #{_multiscaled_bce_loss.5} parent=0 // pred_check
    _
  $region15: #{_multiscaled_bce_loss.5} parent=0 // pred_check_branch
    %30 = sbr.rel (0) target = $region17
  $region16: #{_multiscaled_bce_loss.5} parent=0 // pred_region
    _
  $region17: #{_multiscaled_bce_loss.5} parent=0 // pred_fallthru
    _

</llo_original>
